<compile_context>
chip_gen: v5e
topology: v5e:2x2
jax: 0.10.0
libtpu: 0.0.40
codegen_flags: <defaults>
</compile_context>

<pallas_src>
import functools
import math

import jax
import jax.numpy as jnp
from jax import lax
from jax.experimental import pallas as pl
from jax.experimental.pallas import tpu as pltpu


def _round_up(x, m):
    return ((x + m - 1) // m) * m


_LAG_BLOCK = 8        # lags per serial step (power of two, multiple of 8 sublanes)
_MAX_L_BLOCK = 1024   # lags per grid step (keeps the L grid axis splittable)


def _vmem_capacity_bytes():
    try:
        return int(pltpu.get_tpu_info().vmem_capacity_bytes)
    except Exception:
        return 64 * 1024 * 1024          # conservative (v7x per-TC)


def _choose_l_block(L, P_pad, Hb, vmem_budget, lag_block):
    """Power-of-two lag block per grid step, within the VMEM budget."""
    l_req = max(lag_block, _round_up(L, lag_block))
    lb = lag_block
    while lb < _MAX_L_BLOCK and lb < l_req:
        nxt = lb * 2
        # double-buffered outputs (2 planes) + double-buffered inputs (4 planes)
        need = 16 * nxt * Hb + 32 * P_pad * Hb
        if need > vmem_budget:
            break
        lb = nxt
    return lb


# -----------------------------------------------------------------------------
# Pallas kernel: K_t[l, h] = sum_p W_t[p, h] * A[p, h]^l
# (complex arithmetic carried as separate real / imag float32 planes)
# -----------------------------------------------------------------------------
def _vandermonde_kernel(sel_ref, wt_re_ref, wt_im_ref, a_re_ref, a_im_ref,
                        kt_re_ref, kt_im_ref, *, lag_block, l_block,
                        num_l_blocks):
    LB = lag_block
    a_re = a_re_ref[...]
    a_im = a_im_ref[...]
    w_re = wt_re_ref[...]
    w_im = wt_im_ref[...]
    sel = sel_ref[...]                                  # (LB, LB*P) block-diag ones

    # ---- exact base power A^(l_blk * Lb) via repeated squaring --------------
    # Makes L-grid blocks independent (parallelizable) and bounds the drift of
    # the carried accumulator to O(Lb * eps) instead of O(L * eps).
    if num_l_blocks > 1:
        lb_log2 = l_block.bit_length() - 1              # Lb is a power of two
        cur_re, cur_im = a_re, a_im
        for _ in range(lb_log2):                        # cur = A^Lb
            sr = cur_re * cur_re - cur_im * cur_im
            si = 2.0 * cur_re * cur_im
            cur_re, cur_im = sr, si
        lidx = pl.program_id(1)
        nbits = int(num_l_blocks - 1).bit_length()
        base_re = jnp.ones_like(a_re)
        base_im = jnp.zeros_like(a_im)
        for bit in range(nbits):                        # base = (A^Lb)^lidx
            m = ((lidx >> bit) & 1).astype(jnp.float32)
            nr = base_re * cur_re - base_im * cur_im
            ni = base_re * cur_im + base_im * cur_re
            base_re = base_re + m * (nr - base_re)
            base_im = base_im + m * (ni - base_im)
            if bit + 1 < nbits:
                sr = cur_re * cur_re - cur_im * cur_im
                si = 2.0 * cur_re * cur_im
                cur_re, cur_im = sr, si
        acc_re = w_re * base_re - w_im * base_im        # acc = W * A^(l_blk*Lb)
        acc_im = w_re * base_im + w_im * base_re
    else:
        acc_re, acc_im = w_re, w_im

    # ---- loop-invariant small powers V_j = A^j (j=1..LB-1) and A^LB ---------
    v_re = [a_re]
    v_im = [a_im]
    for _ in range(LB - 1):
        pr = v_re[-1] * a_re - v_im[-1] * a_im
        pi = v_re[-1] * a_im + v_im[-1] * a_re
        v_re.append(pr)
        v_im.append(pi)
    step_re, step_im = v_re[LB - 1], v_im[LB - 1]       # A^LB

    n_blocks = l_block // LB

    def body(blk, carry):
        acc_re, acc_im = carry                          # = W * A^(l0 + blk*LB)
        # Products for j = 0..LB-1.  j=0 is acc itself (V_0 = 1 + 0i): the
        # complex multiply by ones/zeros is skipped, not constant-folded-hoped.
        prods_re = [acc_re]
        prods_im = [acc_im]
        for j in range(1, LB):
            vr, vi = v_re[j - 1], v_im[j - 1]
            prods_re.append(acc_re * vr - acc_im * vi)
            prods_im.append(acc_re * vi + acc_im * vr)
        stacked_re = jnp.concatenate(prods_re, axis=0)  # (LB*P, Hb)
        stacked_im = jnp.concatenate(prods_im, axis=0)

        # MXU performs the P-reduction and the (LB, Hb) row packing in one
        # matmul per plane (the XLU/VALU reduce + concatenate path is gone).
        tile_re = jnp.dot(sel, stacked_re, preferred_element_type=jnp.float32)
        tile_im = jnp.dot(sel, stacked_im, preferred_element_type=jnp.float32)

        l_local = blk * LB
        if not isinstance(blk, int):
            l_local = pl.multiple_of(l_local, LB)
        kt_re_ref[pl.ds(l_local, LB), :] = tile_re      # one aligned (LB,Hb) store
        kt_im_ref[pl.ds(l_local, LB), :] = tile_im

        # Advance the accumulator: one complex multiply by A^LB per block.
        nr = acc_re * step_re - acc_im * step_im
        ni = acc_re * step_im + acc_im * step_re
        return nr, ni

    if n_blocks <= 8:
        carry = (acc_re, acc_im)
        for blk in range(n_blocks):                     # static unroll (LLO sees all)
            carry = body(blk, carry)
    else:
        # TODO(synk): sweep unroll (2 vs 4) and LB (8 vs 16) on hardware.
        lax.fori_loop(0, n_blocks, body, (acc_re, acc_im), unroll=2)


def vandermonde_reservoir_kernel(W, A_bar, kernel_size, lag_block=_LAG_BLOCK,
                                 transpose_output=True):
    """Compute K[h, l] = sum_p W[h, p] * A_bar[p, h]^l with a Pallas kernel.

    W:      complex64, shape (H, P)
    A_bar:  complex64, shape (P, H)
    returns complex64, shape (H, kernel_size)  (or (kernel_size, H) if
            transpose_output=False, which lets an FFT-along-L consumer take the
            kernel's lane-dense layout directly and skip one HBM round trip).
    """
    assert lag_block >= 8 and (lag_block & (lag_block - 1)) == 0
    H, P = W.shape
    L = int(kernel_size)

    Wt = jnp.transpose(W)                               # (P, H), aligned with A_bar
    wt_re = jnp.real(Wt).astype(jnp.float32)
    wt_im = jnp.imag(Wt).astype(jnp.float32)
    a_re = jnp.real(A_bar).astype(jnp.float32)
    a_im = jnp.imag(A_bar).astype(jnp.float32)

    H_pad = _round_up(H, 128)                           # lane-dense feature axis
    P_pad = _round_up(P, 8)                             # sublane-aligned state axis
    if H_pad != H or P_pad != P:
        pad = ((0, P_pad - P), (0, H_pad - H))          # zero rows contribute 0
        wt_re = jnp.pad(wt_re, pad)
        wt_im = jnp.pad(wt_im, pad)
        a_re = jnp.pad(a_re, pad)
        a_im = jnp.pad(a_im, pad)

    # vreg-pressure-aware lane block: one 128-lane column group unless P is
    # small enough that the ~2*LB+10 live (P, Hb) planes still fit 64 vregs.
    Hb = 256 if (P_pad <= 16 and H_pad % 256 == 0) else 128
    Hb = min(Hb, H_pad)

    # Generation-aware VMEM sizing (v5e/v6e 128 MiB, v7x 64 MiB per TC).
    vmem_cap = _vmem_capacity_bytes()
    vmem_limit = min(vmem_cap * 3 // 4, 100 * 1024 * 1024)
    Lb = _choose_l_block(L, P_pad, Hb, int(vmem_limit * 0.75), lag_block)
    L_pad = _round_up(L, Lb)
    nH = H_pad // Hb
    nL = L_pad // Lb

    # (LB, LB*P) block-diagonal ones selector: row j sums rows j*P..(j+1)*P-1
    # of the stacked product planes -> the (LB, Hb) output tile, on the MXU.
    sel = jnp.repeat(jnp.eye(lag_block, dtype=jnp.float32), P_pad, axis=1)

    kernel = functools.partial(_vandermonde_kernel, lag_block=lag_block,
                               l_block=Lb, num_l_blocks=nL)

    cost = pl.CostEstimate(flops=int(14 * L * P * H),
                           transcendentals=0,
                           bytes_accessed=int(8 * L * H + 16 * P * H))

    kt_re, kt_im = pl.pallas_call(
        kernel,
        out_shape=(
            jax.ShapeDtypeStruct((L_pad, H_pad), jnp.float32),
            jax.ShapeDtypeStruct((L_pad, H_pad), jnp.float32),
        ),
        grid=(nH, nL),
        in_specs=[
            pl.BlockSpec((lag_block, lag_block * P_pad), lambda i, l: (0, 0)),
            pl.BlockSpec((P_pad, Hb), lambda i, l: (0, i)),
            pl.BlockSpec((P_pad, Hb), lambda i, l: (0, i)),
            pl.BlockSpec((P_pad, Hb), lambda i, l: (0, i)),
            pl.BlockSpec((P_pad, Hb), lambda i, l: (0, i)),
        ],
        out_specs=(
            pl.BlockSpec((Lb, Hb), lambda i, l: (l, i)),
            pl.BlockSpec((Lb, Hb), lambda i, l: (l, i)),
        ),
        compiler_params=pltpu.CompilerParams(
            # Both axes independent (per-L-block base powers are recomputed
            # exactly), so v7x's two TensorCores can shard either axis.
            dimension_semantics=("parallel", "parallel"),
            vmem_limit_bytes=int(vmem_limit),
        ),
        cost_estimate=cost,
    )(sel, wt_re, wt_im, a_re, a_im)

    K = lax.complex(kt_re[:L, :H], kt_im[:L, :H])       # (L, H) complex64
    if transpose_output:
        return jnp.transpose(K)                         # (H, L) -- PyTorch layout
    return K


# -----------------------------------------------------------------------------
# Deterministic parameter construction (mirrors the module's __init__, the
# discrete=True branch), in plain JAX.
# -----------------------------------------------------------------------------
def _uniform_ring(key, shape, min_radius, max_radius):
    k_r, k_t = jax.random.split(key)
    radius = jax.random.uniform(k_r, shape, minval=min_radius, maxval=max_radius)
    theta = jax.random.uniform(k_t, shape, minval=0.0, maxval=2.0 * math.pi)
    return (radius * jnp.cos(theta) + 1j * radius * jnp.sin(theta)).astype(jnp.complex64)


def _discrete_diagonal_state_matrix(key, d_state, n_ssm,
                                    min_radius, max_radius, min_theta, max_theta):
    k_r, k_t = jax.random.split(key)
    radius = jax.random.uniform(k_r, (d_state, n_ssm), minval=min_radius, maxval=max_radius)
    theta = jax.random.uniform(k_t, (d_state, n_ssm), minval=min_theta, maxval=max_theta)
    return (radius * jnp.cos(theta) + 1j * radius * jnp.sin(theta)).astype(jnp.complex64)


def build_vandermonde_reservoir(key, d_input, d_state, kernel_size,
                                strong_stability, weak_stability,
                                low_oscillation, high_oscillation,
                                min_scaleB=0.0, max_scaleB=1.0,
                                min_scaleC=0.0, max_scaleC=1.0):
    """discrete=True, field='complex' construction; returns (W, A_bar)."""
    k_b, k_c, k_a = jax.random.split(key, 3)

    # ReservoirMatrix(d_in=d_input, d_out=d_state) -> B of shape (P, H)
    B = _uniform_ring(k_b, (d_state, d_input), min_scaleB, max_scaleB)
    # ReservoirMatrix(d_in=d_state, d_out=d_input) -> C of shape (H, P)
    C = _uniform_ring(k_c, (d_input, d_state), min_scaleC, max_scaleC)

    # Discrete diagonal state matrix Lambda_bar of shape (P, H)
    Lambda_bar = _discrete_diagonal_state_matrix(
        k_a, d_state, d_input,
        min_radius=strong_stability, max_radius=weak_stability,
        min_theta=low_oscillation, max_theta=high_oscillation)

    # _normalization: B_bar = sqrt(max(1 - |Lambda|^2, 0)) * B
    gamma = jnp.sqrt(jnp.maximum(1.0 - jnp.abs(Lambda_bar) ** 2, 0.0))
    B_bar = gamma.astype(jnp.complex64) * B

    # W[h, p] = C[h, p] * B_bar[p, h]
    W = C * jnp.transpose(B_bar)
    return W, Lambda_bar


if __name__ == "__main__":
    # Small, forward-consistent shapes
    d_input = 8       # H
    d_state = 32      # P
    kernel_size = 16  # L

    key = jax.random.PRNGKey(0)
    W, A_bar = build_vandermonde_reservoir(
        key, d_input, d_state, kernel_size,
        strong_stability=0.9, weak_stability=0.99,
        low_oscillation=0.0, high_oscillation=2.0 * math.pi,
        min_scaleB=0.0, max_scaleB=1.0, min_scaleC=0.0, max_scaleC=1.0)

    # forward(): returns (K, None) with K of shape (H, L), complex64
    K = vandermonde_reservoir_kernel(W, A_bar, kernel_size)
    K = jax.block_until_ready(K)

    # Pure-JAX reference (same math as the PyTorch __init__)
    powers = jnp.arange(kernel_size, dtype=jnp.float32)
    V = A_bar[..., None] ** powers                       # (P, H, L)
    K_ref = jnp.einsum('hp,phl->hl', W, V)               # (H, L)

    assert K.shape == (d_input, kernel_size)
    assert K.dtype == jnp.complex64
    assert jnp.allclose(K, K_ref, atol=1e-4, rtol=1e-4)

    print("KERNEL_OK")
</pallas_src>

<mosaic_0001>
module attributes {stable_mosaic.version = 11 : i64} {
  func.func @_vandermonde_kernel(%arg0: i32, %arg1: i32, %arg2: memref<8x256xf32, #tpu.memory_space<vmem>>, %arg3: memref<32x128xf32, #tpu.memory_space<vmem>>, %arg4: memref<32x128xf32, #tpu.memory_space<vmem>>, %arg5: memref<32x128xf32, #tpu.memory_space<vmem>>, %arg6: memref<32x128xf32, #tpu.memory_space<vmem>>, %arg7: memref<16x128xf32, #tpu.memory_space<vmem>>, %arg8: memref<16x128xf32, #tpu.memory_space<vmem>>) attributes {dimension_semantics = [#tpu.dimension_semantics<parallel>, #tpu.dimension_semantics<parallel>], iteration_bounds = array<i64: 1, 1>, scalar_prefetch = 0 : i64, scratch_operands = 0 : i64, tpu.core_type = #tpu.core_type<tc>, window_params = [{pipeline_mode = #tpu.pipeline_mode<synchronous>, transform_indices = @transform_0, window_bounds = array<i64: 8, 256>}, {transform_indices = @transform_1, window_bounds = array<i64: 32, 128>}, {transform_indices = @transform_2, window_bounds = array<i64: 32, 128>}, {transform_indices = @transform_3, window_bounds = array<i64: 32, 128>}, {transform_indices = @transform_4, window_bounds = array<i64: 32, 128>}, {transform_indices = @transform_5, window_bounds = array<i64: 16, 128>}, {transform_indices = @transform_6, window_bounds = array<i64: 16, 128>}]} {
    %c0 = arith.constant 0 : index
    %c0_0 = arith.constant 0 : index
    %0 = vector.load %arg5[%c0, %c0_0] : memref<32x128xf32, #tpu.memory_space<vmem>>, vector<32x128xf32>
    %c0_1 = arith.constant 0 : index
    %c0_2 = arith.constant 0 : index
    %1 = vector.load %arg6[%c0_1, %c0_2] : memref<32x128xf32, #tpu.memory_space<vmem>>, vector<32x128xf32>
    %c0_3 = arith.constant 0 : index
    %c0_4 = arith.constant 0 : index
    %2 = vector.load %arg3[%c0_3, %c0_4] : memref<32x128xf32, #tpu.memory_space<vmem>>, vector<32x128xf32>
    %c0_5 = arith.constant 0 : index
    %c0_6 = arith.constant 0 : index
    %3 = vector.load %arg4[%c0_5, %c0_6] : memref<32x128xf32, #tpu.memory_space<vmem>>, vector<32x128xf32>
    %c0_7 = arith.constant 0 : index
    %c0_8 = arith.constant 0 : index
    %4 = vector.load %arg2[%c0_7, %c0_8] : memref<8x256xf32, #tpu.memory_space<vmem>>, vector<8x256xf32>
    %5 = arith.mulf %0, %0 : vector<32x128xf32>
    %6 = arith.mulf %1, %1 : vector<32x128xf32>
    %7 = arith.subf %5, %6 : vector<32x128xf32>
    %8 = arith.mulf %0, %1 : vector<32x128xf32>
    %9 = arith.mulf %1, %0 : vector<32x128xf32>
    %10 = arith.addf %8, %9 : vector<32x128xf32>
    %11 = arith.mulf %7, %0 : vector<32x128xf32>
    %12 = arith.mulf %10, %1 : vector<32x128xf32>
    %13 = arith.subf %11, %12 : vector<32x128xf32>
    %14 = arith.mulf %7, %1 : vector<32x128xf32>
    %15 = arith.mulf %10, %0 : vector<32x128xf32>
    %16 = arith.addf %14, %15 : vector<32x128xf32>
    %17 = arith.mulf %13, %0 : vector<32x128xf32>
    %18 = arith.mulf %16, %1 : vector<32x128xf32>
    %19 = arith.subf %17, %18 : vector<32x128xf32>
    %20 = arith.mulf %13, %1 : vector<32x128xf32>
    %21 = arith.mulf %16, %0 : vector<32x128xf32>
    %22 = arith.addf %20, %21 : vector<32x128xf32>
    %23 = arith.mulf %19, %0 : vector<32x128xf32>
    %24 = arith.mulf %22, %1 : vector<32x128xf32>
    %25 = arith.subf %23, %24 : vector<32x128xf32>
    %26 = arith.mulf %19, %1 : vector<32x128xf32>
    %27 = arith.mulf %22, %0 : vector<32x128xf32>
    %28 = arith.addf %26, %27 : vector<32x128xf32>
    %29 = arith.mulf %25, %0 : vector<32x128xf32>
    %30 = arith.mulf %28, %1 : vector<32x128xf32>
    %31 = arith.subf %29, %30 : vector<32x128xf32>
    %32 = arith.mulf %25, %1 : vector<32x128xf32>
    %33 = arith.mulf %28, %0 : vector<32x128xf32>
    %34 = arith.addf %32, %33 : vector<32x128xf32>
    %35 = arith.mulf %31, %0 : vector<32x128xf32>
    %36 = arith.mulf %34, %1 : vector<32x128xf32>
    %37 = arith.subf %35, %36 : vector<32x128xf32>
    %38 = arith.mulf %31, %1 : vector<32x128xf32>
    %39 = arith.mulf %34, %0 : vector<32x128xf32>
    %40 = arith.addf %38, %39 : vector<32x128xf32>
    %41 = arith.mulf %37, %0 : vector<32x128xf32>
    %42 = arith.mulf %40, %1 : vector<32x128xf32>
    %43 = arith.subf %41, %42 : vector<32x128xf32>
    %44 = arith.mulf %37, %1 : vector<32x128xf32>
    %45 = arith.mulf %40, %0 : vector<32x128xf32>
    %46 = arith.addf %44, %45 : vector<32x128xf32>
    %47 = arith.mulf %2, %0 : vector<32x128xf32>
    %48 = arith.mulf %3, %1 : vector<32x128xf32>
    %49 = arith.subf %47, %48 : vector<32x128xf32>
    %50 = arith.mulf %2, %1 : vector<32x128xf32>
    %51 = arith.mulf %3, %0 : vector<32x128xf32>
    %52 = arith.addf %50, %51 : vector<32x128xf32>
    %53 = arith.mulf %2, %7 : vector<32x128xf32>
    %54 = arith.mulf %3, %10 : vector<32x128xf32>
    %55 = arith.subf %53, %54 : vector<32x128xf32>
    %56 = arith.mulf %2, %10 : vector<32x128xf32>
    %57 = arith.mulf %3, %7 : vector<32x128xf32>
    %58 = arith.addf %56, %57 : vector<32x128xf32>
    %59 = arith.mulf %2, %13 : vector<32x128xf32>
    %60 = arith.mulf %3, %16 : vector<32x128xf32>
    %61 = arith.subf %59, %60 : vector<32x128xf32>
    %62 = arith.mulf %2, %16 : vector<32x128xf32>
    %63 = arith.mulf %3, %13 : vector<32x128xf32>
    %64 = arith.addf %62, %63 : vector<32x128xf32>
    %65 = arith.mulf %2, %19 : vector<32x128xf32>
    %66 = arith.mulf %3, %22 : vector<32x128xf32>
    %67 = arith.subf %65, %66 : vector<32x128xf32>
    %68 = arith.mulf %2, %22 : vector<32x128xf32>
    %69 = arith.mulf %3, %19 : vector<32x128xf32>
    %70 = arith.addf %68, %69 : vector<32x128xf32>
    %71 = arith.mulf %2, %25 : vector<32x128xf32>
    %72 = arith.mulf %3, %28 : vector<32x128xf32>
    %73 = arith.subf %71, %72 : vector<32x128xf32>
    %74 = arith.mulf %2, %28 : vector<32x128xf32>
    %75 = arith.mulf %3, %25 : vector<32x128xf32>
    %76 = arith.addf %74, %75 : vector<32x128xf32>
    %77 = arith.mulf %2, %31 : vector<32x128xf32>
    %78 = arith.mulf %3, %34 : vector<32x128xf32>
    %79 = arith.subf %77, %78 : vector<32x128xf32>
    %80 = arith.mulf %2, %34 : vector<32x128xf32>
    %81 = arith.mulf %3, %31 : vector<32x128xf32>
    %82 = arith.addf %80, %81 : vector<32x128xf32>
    %83 = arith.mulf %2, %37 : vector<32x128xf32>
    %84 = arith.mulf %3, %40 : vector<32x128xf32>
    %85 = arith.subf %83, %84 : vector<32x128xf32>
    %86 = arith.mulf %2, %40 : vector<32x128xf32>
    %87 = arith.mulf %3, %37 : vector<32x128xf32>
    %88 = arith.addf %86, %87 : vector<32x128xf32>
    %89 = tpu.concatenate %2, %49, %55, %61, %67, %73, %79, %85 in 0 : vector<32x128xf32>, vector<32x128xf32>, vector<32x128xf32>, vector<32x128xf32>, vector<32x128xf32>, vector<32x128xf32>, vector<32x128xf32>, vector<32x128xf32> -> vector<256x128xf32>
    %90 = tpu.concatenate %3, %52, %58, %64, %70, %76, %82, %88 in 0 : vector<32x128xf32>, vector<32x128xf32>, vector<32x128xf32>, vector<32x128xf32>, vector<32x128xf32>, vector<32x128xf32>, vector<32x128xf32>, vector<32x128xf32> -> vector<256x128xf32>
    %cst = arith.constant dense<0.000000e+00> : vector<8x128xf32>
    %91 = tpu.matmul %4, %89, %cst {dimension_numbers = #tpu.dot_dimension_numbers<[1], [0], [0], [1], [0, 0, 1, 1], [], []>} : vector<8x256xf32>, vector<256x128xf32>, vector<8x128xf32> -> vector<8x128xf32>
    %cst_9 = arith.constant dense<0.000000e+00> : vector<8x128xf32>
    %92 = tpu.matmul %4, %90, %cst_9 {dimension_numbers = #tpu.dot_dimension_numbers<[1], [0], [0], [1], [0, 0, 1, 1], [], []>} : vector<8x256xf32>, vector<256x128xf32>, vector<8x128xf32> -> vector<8x128xf32>
    %c0_10 = arith.constant 0 : index
    %c0_11 = arith.constant 0 : index
    %93 = vector.load %arg7[%c0_10, %c0_11] : memref<16x128xf32, #tpu.memory_space<vmem>>, vector<8x128xf32>
    tpu.vector_store %arg7[%c0_10, %c0_11], %91 {strides = array<i32>} : memref<16x128xf32, #tpu.memory_space<vmem>>, vector<8x128xf32>,
    %c0_12 = arith.constant 0 : index
    %c0_13 = arith.constant 0 : index
    %94 = vector.load %arg8[%c0_12, %c0_13] : memref<16x128xf32, #tpu.memory_space<vmem>>, vector<8x128xf32>
    tpu.vector_store %arg8[%c0_12, %c0_13], %92 {strides = array<i32>} : memref<16x128xf32, #tpu.memory_space<vmem>>, vector<8x128xf32>,
    %95 = arith.mulf %2, %43 : vector<32x128xf32>
    %96 = arith.mulf %3, %46 : vector<32x128xf32>
    %97 = arith.subf %95, %96 : vector<32x128xf32>
    %98 = arith.mulf %2, %46 : vector<32x128xf32>
    %99 = arith.mulf %3, %43 : vector<32x128xf32>
    %100 = arith.addf %98, %99 : vector<32x128xf32>
    %101 = arith.mulf %97, %0 : vector<32x128xf32>
    %102 = arith.mulf %100, %1 : vector<32x128xf32>
    %103 = arith.subf %101, %102 : vector<32x128xf32>
    %104 = arith.mulf %97, %1 : vector<32x128xf32>
    %105 = arith.mulf %100, %0 : vector<32x128xf32>
    %106 = arith.addf %104, %105 : vector<32x128xf32>
    %107 = arith.mulf %97, %7 : vector<32x128xf32>
    %108 = arith.mulf %100, %10 : vector<32x128xf32>
    %109 = arith.subf %107, %108 : vector<32x128xf32>
    %110 = arith.mulf %97, %10 : vector<32x128xf32>
    %111 = arith.mulf %100, %7 : vector<32x128xf32>
    %112 = arith.addf %110, %111 : vector<32x128xf32>
    %113 = arith.mulf %97, %13 : vector<32x128xf32>
    %114 = arith.mulf %100, %16 : vector<32x128xf32>
    %115 = arith.subf %113, %114 : vector<32x128xf32>
    %116 = arith.mulf %97, %16 : vector<32x128xf32>
    %117 = arith.mulf %100, %13 : vector<32x128xf32>
    %118 = arith.addf %116, %117 : vector<32x128xf32>
    %119 = arith.mulf %97, %19 : vector<32x128xf32>
    %120 = arith.mulf %100, %22 : vector<32x128xf32>
    %121 = arith.subf %119, %120 : vector<32x128xf32>
    %122 = arith.mulf %97, %22 : vector<32x128xf32>
    %123 = arith.mulf %100, %19 : vector<32x128xf32>
    %124 = arith.addf %122, %123 : vector<32x128xf32>
    %125 = arith.mulf %97, %25 : vector<32x128xf32>
    %126 = arith.mulf %100, %28 : vector<32x128xf32>
    %127 = arith.subf %125, %126 : vector<32x128xf32>
    %128 = arith.mulf %97, %28 : vector<32x128xf32>
    %129 = arith.mulf %100, %25 : vector<32x128xf32>
    %130 = arith.addf %128, %129 : vector<32x128xf32>
    %131 = arith.mulf %97, %31 : vector<32x128xf32>
    %132 = arith.mulf %100, %34 : vector<32x128xf32>
    %133 = arith.subf %131, %132 : vector<32x128xf32>
    %134 = arith.mulf %97, %34 : vector<32x128xf32>
    %135 = arith.mulf %100, %31 : vector<32x128xf32>
    %136 = arith.addf %134, %135 : vector<32x128xf32>
    %137 = arith.mulf %97, %37 : vector<32x128xf32>
    %138 = arith.mulf %100, %40 : vector<32x128xf32>
    %139 = arith.subf %137, %138 : vector<32x128xf32>
    %140 = arith.mulf %97, %40 : vector<32x128xf32>
    %141 = arith.mulf %100, %37 : vector<32x128xf32>
    %142 = arith.addf %140, %141 : vector<32x128xf32>
    %143 = tpu.concatenate %97, %103, %109, %115, %121, %127, %133, %139 in 0 : vector<32x128xf32>, vector<32x128xf32>, vector<32x128xf32>, vector<32x128xf32>, vector<32x128xf32>, vector<32x128xf32>, vector<32x128xf32>, vector<32x128xf32> -> vector<256x128xf32>
    %144 = tpu.concatenate %100, %106, %112, %118, %124, %130, %136, %142 in 0 : vector<32x128xf32>, vector<32x128xf32>, vector<32x128xf32>, vector<32x128xf32>, vector<32x128xf32>, vector<32x128xf32>, vector<32x128xf32>, vector<32x128xf32> -> vector<256x128xf32>
    %cst_14 = arith.constant dense<0.000000e+00> : vector<8x128xf32>
    %145 = tpu.matmul %4, %143, %cst_14 {dimension_numbers = #tpu.dot_dimension_numbers<[1], [0], [0], [1], [0, 0, 1, 1], [], []>} : vector<8x256xf32>, vector<256x128xf32>, vector<8x128xf32> -> vector<8x128xf32>
    %cst_15 = arith.constant dense<0.000000e+00> : vector<8x128xf32>
    %146 = tpu.matmul %4, %144, %cst_15 {dimension_numbers = #tpu.dot_dimension_numbers<[1], [0], [0], [1], [0, 0, 1, 1], [], []>} : vector<8x256xf32>, vector<256x128xf32>, vector<8x128xf32> -> vector<8x128xf32>
    %c8 = arith.constant 8 : index
    %c0_16 = arith.constant 0 : index
    %147 = vector.load %arg7[%c8, %c0_16] : memref<16x128xf32, #tpu.memory_space<vmem>>, vector<8x128xf32>
    tpu.vector_store %arg7[%c8, %c0_16], %145 {strides = array<i32>} : memref<16x128xf32, #tpu.memory_space<vmem>>, vector<8x128xf32>,
    %c8_17 = arith.constant 8 : index
    %c0_18 = arith.constant 0 : index
    %148 = vector.load %arg8[%c8_17, %c0_18] : memref<16x128xf32, #tpu.memory_space<vmem>>, vector<8x128xf32>
    tpu.vector_store %arg8[%c8_17, %c0_18], %146 {strides = array<i32>} : memref<16x128xf32, #tpu.memory_space<vmem>>, vector<8x128xf32>,
    return
  }
  func.func @transform_0(%arg0: i32, %arg1: i32) -> (i32, i32) {
    %c0_i32 = arith.constant 0 : i32
    %c0_i32_0 = arith.constant 0 : i32
    %c0_i32_1 = arith.constant 0 : i32
    return %c0_i32, %c0_i32_0 : i32, i32
  }
  func.func @transform_1(%arg0: i32, %arg1: i32) -> (i32, i32) {
    %c0_i32 = arith.constant 0 : i32
    %c0_i32_0 = arith.constant 0 : i32
    return %c0_i32, %arg0 : i32, i32
  }
  func.func @transform_2(%arg0: i32, %arg1: i32) -> (i32, i32) {
    %c0_i32 = arith.constant 0 : i32
    %c0_i32_0 = arith.constant 0 : i32
    return %c0_i32, %arg0 : i32, i32
  }
  func.func @transform_3(%arg0: i32, %arg1: i32) -> (i32, i32) {
    %c0_i32 = arith.constant 0 : i32
    %c0_i32_0 = arith.constant 0 : i32
    return %c0_i32, %arg0 : i32, i32
  }
  func.func @transform_4(%arg0: i32, %arg1: i32) -> (i32, i32) {
    %c0_i32 = arith.constant 0 : i32
    %c0_i32_0 = arith.constant 0 : i32
    return %c0_i32, %arg0 : i32, i32
  }
  func.func @transform_5(%arg0: i32, %arg1: i32) -> (i32, i32) {
    %c0_i32 = arith.constant 0 : i32
    return %arg1, %arg0 : i32, i32
  }
  func.func @transform_6(%arg0: i32, %arg1: i32) -> (i32, i32) {
    %c0_i32 = arith.constant 0 : i32
    return %arg1, %arg0 : i32, i32
  }
}

</mosaic_0001>

<llo_original>
// kernel: tpu_custom_call.1
$region0: #{tpu_custom_call.1}
  #allocation0 [shape = 'u32[]', space=smem, size = 0x4, offset = 0x4, fixed_abs, tag = 'smem constant byte address 0x4 - core index']
  #allocation1 [shape = 'u32[72,128]{1,0:T(1,128)}', space=vmem, size = 0x9000, scoped, tag = 'internal scratch']
  %s0 = inlined_call_operand.hbm [shape: f32[8,256], index: 0, kind: input, shape index: {}]
  %s1 = inlined_call_operand.hbm [shape: f32[32,128], index: 1, kind: input, shape index: {}]
  %s2 = inlined_call_operand.hbm [shape: f32[32,128], index: 2, kind: input, shape index: {}]
  %s3 = inlined_call_operand.hbm [shape: f32[32,128], index: 3, kind: input, shape index: {}]
  %s4 = inlined_call_operand.hbm [shape: f32[32,128], index: 4, kind: input, shape index: {}]
  %s5 = inlined_call_operand.hbm [shape: f32[16,128], index: 5, kind: output, shape index: {0}]
  %s6 = inlined_call_operand.hbm [shape: f32[16,128], index: 6, kind: output, shape index: {1}]
  %7 = xla_tuple %s5, %s6
  %s8 = sld [smem:[#allocation0]]
  $region58: #{tpu_custom_call.1} parent=0
    _
  %s10 = ssub.s32 1, %s8
  %s11 = scalar_select 0, %s10, %s8
  $region1: #{tpu_custom_call.1} parent=0
    #allocation2 [shape = 'u8[8192]{0}', space=vmem, size = 0x2000, scoped, tag = 'input window, operand 0, single buffered']
    #allocation3 [shape = 's32[1]{0}', space=sflag, size = 0x4, scoped, tag = 'scoped memory for tpu_custom_call.1']
    #allocation4 [shape = 's32[1]{0}', space=sflag, size = 0x4, scoped, tag = 'scoped memory for tpu_custom_call.1']
    #allocation5 [shape = 'u8[16384]{0}', space=vmem, size = 0x4000, scoped, tag = 'input window, operand 1, single buffered']
    #allocation6 [shape = 's32[1]{0}', space=sflag, size = 0x4, scoped, tag = 'scoped memory for tpu_custom_call.1']
    #allocation7 [shape = 'u8[16384]{0}', space=vmem, size = 0x4000, scoped, tag = 'input window, operand 2, single buffered']
    #allocation8 [shape = 'u8[16384]{0}', space=vmem, size = 0x4000, scoped, tag = 'input window, operand 3, single buffered']
    #allocation9 [shape = 's32[1]{0}', space=sflag, size = 0x4, scoped, tag = 'scoped memory for tpu_custom_call.1']
    #allocation10 [shape = 'u8[16384]{0}', space=vmem, size = 0x4000, scoped, tag = 'input window, operand 4, single buffered']
    #allocation11 [shape = 'u8[8192]{0}', space=vmem, size = 0x2000, scoped, tag = 'output window, operand 0, single buffered']
    #allocation12 [shape = 'u8[8192]{0}', space=vmem, size = 0x2000, scoped, tag = 'output window, operand 1, single buffered']
    #allocation13 [shape = 's32[1]{0}', space=sflag, size = 0x4, scoped, tag = 'scoped memory for tpu_custom_call.1']
    %12 = vsyncpa [#allocation3], 0
    %13 = vsyncpa [#allocation6], 0
    %14 = vsyncpa [#allocation9], 0
    %15 = vsyncpa [#allocation4], 0
    %16 = vsyncpa [#allocation13], 0
    // Predicated region
    $region2: #{tpu_custom_call.1} parent=1 // pred_check
      _
    $region3: #{tpu_custom_call.1} parent=1 // pred_check_branch
      %18 = sbr.rel (0) target = $region5
    $region4: #{tpu_custom_call.1} parent=1 // pred_region
      %20 = vsyncadd [#allocation3], 0
      %s22 = sshll.u32 %s0, 4
      %s23 = int_to_ptr.hbm [resolvable:$true] %s22
      %s24 = sshll.u32 [#allocation2], 4
      %s25 = int_to_ptr.vmem [resolvable:$true] %s24
      %27 = dma.hbm_to_vmem [thread:$0]  %s23, 256, %s25, [#allocation3]
    $region5: #{tpu_custom_call.1} parent=1 // pred_fallthru
      _
    // Predicated region
    $region6: #{tpu_custom_call.1} parent=1 // pred_check
      _
    $region7: #{tpu_custom_call.1} parent=1 // pred_check_branch
      %29 = sbr.rel (0) target = $region9
    $region8: #{tpu_custom_call.1} parent=1 // pred_region
      %31 = vsyncadd [#allocation6], 0
      %s32 = sshll.u32 %s1, 4
      %s33 = int_to_ptr.hbm [resolvable:$true] %s32
      %s34 = sshll.u32 [#allocation5], 4
      %s35 = int_to_ptr.vmem [resolvable:$true] %s34
      %40 = dma.hbm_to_vmem [thread:$0]  %s33, 512, %s35, [#allocation6], 128, 128, 8
    $region9: #{tpu_custom_call.1} parent=1 // pred_fallthru
      _
    // Predicated region
    $region10: #{tpu_custom_call.1} parent=1 // pred_check
      _
    $region11: #{tpu_custom_call.1} parent=1 // pred_check_branch
      %42 = sbr.rel (0) target = $region13
    $region12: #{tpu_custom_call.1} parent=1 // pred_region
      %44 = vsyncadd [#allocation6], 0
      %s45 = sshll.u32 %s2, 4
      %s46 = int_to_ptr.hbm [resolvable:$true] %s45
      %s47 = sshll.u32 [#allocation7], 4
      %s48 = int_to_ptr.vmem [resolvable:$true] %s47
      %53 = dma.hbm_to_vmem [thread:$0]  %s46, 512, %s48, [#allocation6], 128, 128, 8
    $region13: #{tpu_custom_call.1} parent=1 // pred_fallthru
      _
    // Predicated region
    $region14: #{tpu_custom_call.1} parent=1 // pred_check
      _
    $region15: #{tpu_custom_call.1} parent=1 // pred_check_branch
      %55 = sbr.rel (0) target = $region17
    $region16: #{tpu_custom_call.1} parent=1 // pred_region
      %57 = vsyncadd [#allocation9], 0
      %s58 = sshll.u32 %s3, 4
      %s59 = int_to_ptr.hbm [resolvable:$true] %s58
      %s60 = sshll.u32 [#allocation8], 4
      %s61 = int_to_ptr.vmem [resolvable:$true] %s60
      %66 = dma.hbm_to_vmem [thread:$0]  %s59, 512, %s61, [#allocation9], 128, 128, 8
    $region17: #{tpu_custom_call.1} parent=1 // pred_fallthru
      _
    // Predicated region
    $region18: #{tpu_custom_call.1} parent=1 // pred_check
      _
    $region19: #{tpu_custom_call.1} parent=1 // pred_check_branch
      %68 = sbr.rel (0) target = $region21
    $region20: #{tpu_custom_call.1} parent=1 // pred_region
      %70 = vsyncadd [#allocation9], 0
      %s71 = sshll.u32 %s4, 4
      %s72 = int_to_ptr.hbm [resolvable:$true] %s71
      %s73 = sshll.u32 [#allocation10], 4
      %s74 = int_to_ptr.vmem [resolvable:$true] %s73
      %79 = dma.hbm_to_vmem [thread:$0]  %s72, 512, %s74, [#allocation9], 128, 128, 8
    $region21: #{tpu_custom_call.1} parent=1 // pred_fallthru
      _
    // Predicated region
    $region22: #{tpu_custom_call.1} parent=1 // pred_check
      _
    $region23: #{tpu_custom_call.1} parent=1 // pred_check_branch
      %81 = sbr.rel (0) target = $region25
    $region24: #{tpu_custom_call.1} parent=1 // pred_region
      %83 = dma.done [#allocation3], 256
    $region25: #{tpu_custom_call.1} parent=1 // pred_fallthru
      _
    // Predicated region
    $region26: #{tpu_custom_call.1} parent=1 // pred_check
      _
    $region27: #{tpu_custom_call.1} parent=1 // pred_check_branch
      %85 = sbr.rel (0) target = $region29
    $region28: #{tpu_custom_call.1} parent=1 // pred_region
      %87 = dma.done [#allocation6], 512
    $region29: #{tpu_custom_call.1} parent=1 // pred_fallthru
      _
    // Predicated region
    $region30: #{tpu_custom_call.1} parent=1 // pred_check
      _
    $region31: #{tpu_custom_call.1} parent=1 // pred_check_branch
      %89 = sbr.rel (0) target = $region33
    $region32: #{tpu_custom_call.1} parent=1 // pred_region
      %91 = dma.done [#allocation6], 512
    $region33: #{tpu_custom_call.1} parent=1 // pred_fallthru
      _
    // Predicated region
    $region34: #{tpu_custom_call.1} parent=1 // pred_check
      _
    $region35: #{tpu_custom_call.1} parent=1 // pred_check_branch
      %93 = sbr.rel (0) target = $region37
    $region36: #{tpu_custom_call.1} parent=1 // pred_region
      %95 = dma.done [#allocation9], 512
    $region37: #{tpu_custom_call.1} parent=1 // pred_fallthru
      _
    // Predicated region
    $region38: #{tpu_custom_call.1} parent=1 // pred_check
      _
    $region39: #{tpu_custom_call.1} parent=1 // pred_check_branch
      %97 = sbr.rel (0) target = $region41
    $region40: #{tpu_custom_call.1} parent=1 // pred_region
      %99 = dma.done [#allocation9], 512
    $region41: #{tpu_custom_call.1} parent=1 // pred_fallthru
      _
    %v100 = vld [vmem:[#allocation8] sm:$0xff]
    %v101 = vld [vmem:[#allocation8 + $0x8] sm:$0xff]
    %v102 = vld [vmem:[#allocation8 + $0x10] sm:$0xff]
    %v103 = vld [vmem:[#allocation8 + $0x18] sm:$0xff]
    %v104 = vld [vmem:[#allocation10] sm:$0xff]
    %v105 = vld [vmem:[#allocation10 + $0x8] sm:$0xff]
    %v106 = vld [vmem:[#allocation10 + $0x10] sm:$0xff]
    %v107 = vld [vmem:[#allocation10 + $0x18] sm:$0xff]
    %v108 = vld [vmem:[#allocation5] sm:$0xff]
    %v109 = vld [vmem:[#allocation5 + $0x8] sm:$0xff]
    %v110 = vld [vmem:[#allocation5 + $0x10] sm:$0xff]
    %v111 = vld [vmem:[#allocation5 + $0x18] sm:$0xff]
    %v112 = vld [vmem:[#allocation7] sm:$0xff]
    %v113 = vld [vmem:[#allocation7 + $0x8] sm:$0xff]
    %v114 = vld [vmem:[#allocation7 + $0x10] sm:$0xff]
    %v115 = vld [vmem:[#allocation7 + $0x18] sm:$0xff]
    %v116 = vld [vmem:[#allocation2] sm:$0xff]
    %v117 = vld [vmem:[#allocation2 + $0x8] sm:$0xff]
    %v118 = vmul.f32 %v100, %v100
    %v119 = vmul.f32 %v101, %v101
    %v120 = vmul.f32 %v102, %v102
    %v121 = vmul.f32 %v103, %v103
    %v122 = vmul.f32 %v104, %v104
    %v123 = vmul.f32 %v105, %v105
    %v124 = vmul.f32 %v106, %v106
    %v125 = vmul.f32 %v107, %v107
    %v126 = vsub.f32 %v118, %v122
    %v127 = vsub.f32 %v119, %v123
    %v128 = vsub.f32 %v120, %v124
    %v129 = vsub.f32 %v121, %v125
    %v130 = vmul.f32 %v100, %v104
    %v131 = vmul.f32 %v101, %v105
    %v132 = vmul.f32 %v102, %v106
    %v133 = vmul.f32 %v103, %v107
    %v134 = vadd.f32 %v130, %v130
    %v135 = vadd.f32 %v131, %v131
    %v136 = vadd.f32 %v132, %v132
    %v137 = vadd.f32 %v133, %v133
    %v138 = vmul.f32 %v126, %v100
    %v139 = vmul.f32 %v127, %v101
    %v140 = vmul.f32 %v128, %v102
    %v141 = vmul.f32 %v129, %v103
    %v142 = vmul.f32 %v134, %v104
    %v143 = vmul.f32 %v135, %v105
    %v144 = vmul.f32 %v136, %v106
    %v145 = vmul.f32 %v137, %v107
    %v146 = vsub.f32 %v138, %v142
    %v147 = vsub.f32 %v139, %v143
    %v148 = vsub.f32 %v140, %v144
    %v149 = vsub.f32 %v141, %v145
    %v150 = vmul.f32 %v126, %v104
    %v151 = vmul.f32 %v127, %v105
    %v152 = vmul.f32 %v128, %v106
    %v153 = vmul.f32 %v129, %v107
    %v154 = vmul.f32 %v134, %v100
    %v155 = vmul.f32 %v135, %v101
    %v156 = vmul.f32 %v136, %v102
    %v157 = vmul.f32 %v137, %v103
    %v158 = vadd.f32 %v150, %v154
    %v159 = vadd.f32 %v151, %v155
    %v160 = vadd.f32 %v152, %v156
    %v161 = vadd.f32 %v153, %v157
    %v162 = vmul.f32 %v146, %v100
    %v163 = vmul.f32 %v147, %v101
    %v164 = vmul.f32 %v148, %v102
    %v165 = vmul.f32 %v149, %v103
    %v166 = vmul.f32 %v158, %v104
    %v167 = vmul.f32 %v159, %v105
    %v168 = vmul.f32 %v160, %v106
    %v169 = vmul.f32 %v161, %v107
    %v170 = vsub.f32 %v162, %v166
    %v171 = vsub.f32 %v163, %v167
    %v172 = vsub.f32 %v164, %v168
    %v173 = vsub.f32 %v165, %v169
    %v174 = vmul.f32 %v146, %v104
    %v175 = vmul.f32 %v147, %v105
    %v176 = vmul.f32 %v148, %v106
    %v177 = vmul.f32 %v149, %v107
    %v178 = vmul.f32 %v158, %v100
    %v179 = vmul.f32 %v159, %v101
    %v180 = vmul.f32 %v160, %v102
    %v181 = vmul.f32 %v161, %v103
    %v182 = vadd.f32 %v174, %v178
    %v183 = vadd.f32 %v175, %v179
    %v184 = vadd.f32 %v176, %v180
    %v185 = vadd.f32 %v177, %v181
    %v186 = vmul.f32 %v170, %v100
    %v187 = vmul.f32 %v171, %v101
    %v188 = vmul.f32 %v172, %v102
    %v189 = vmul.f32 %v173, %v103
    %v190 = vmul.f32 %v182, %v104
    %v191 = vmul.f32 %v183, %v105
    %v192 = vmul.f32 %v184, %v106
    %v193 = vmul.f32 %v185, %v107
    %v194 = vsub.f32 %v186, %v190
    %v195 = vsub.f32 %v187, %v191
    %v196 = vsub.f32 %v188, %v192
    %v197 = vsub.f32 %v189, %v193
    %v198 = vmul.f32 %v170, %v104
    %v199 = vmul.f32 %v171, %v105
    %v200 = vmul.f32 %v172, %v106
    %v201 = vmul.f32 %v173, %v107
    %v202 = vmul.f32 %v182, %v100
    %v203 = vmul.f32 %v183, %v101
    %v204 = vmul.f32 %v184, %v102
    %v205 = vmul.f32 %v185, %v103
    %v206 = vadd.f32 %v198, %v202
    %v207 = vadd.f32 %v199, %v203
    %v208 = vadd.f32 %v200, %v204
    %v209 = vadd.f32 %v201, %v205
    %v210 = vmul.f32 %v194, %v100
    %v211 = vmul.f32 %v195, %v101
    %v212 = vmul.f32 %v196, %v102
    %v213 = vmul.f32 %v197, %v103
    %v214 = vmul.f32 %v206, %v104
    %v215 = vmul.f32 %v207, %v105
    %v216 = vmul.f32 %v208, %v106
    %v217 = vmul.f32 %v209, %v107
    %v218 = vsub.f32 %v210, %v214
    %v219 = vsub.f32 %v211, %v215
    %v220 = vsub.f32 %v212, %v216
    %v221 = vsub.f32 %v213, %v217
    %v222 = vmul.f32 %v194, %v104
    %v223 = vmul.f32 %v195, %v105
    %v224 = vmul.f32 %v196, %v106
    %v225 = vmul.f32 %v197, %v107
    %v226 = vmul.f32 %v206, %v100
    %v227 = vmul.f32 %v207, %v101
    %v228 = vmul.f32 %v208, %v102
    %v229 = vmul.f32 %v209, %v103
    %v230 = vadd.f32 %v222, %v226
    %v231 = vadd.f32 %v223, %v227
    %v232 = vadd.f32 %v224, %v228
    %v233 = vadd.f32 %v225, %v229
    %v234 = vmul.f32 %v218, %v100
    %v235 = vmul.f32 %v219, %v101
    %v236 = vmul.f32 %v220, %v102
    %v237 = vmul.f32 %v221, %v103
    %v238 = vmul.f32 %v230, %v104
    %v239 = vmul.f32 %v231, %v105
    %v240 = vmul.f32 %v232, %v106
    %v241 = vmul.f32 %v233, %v107
    %v242 = vsub.f32 %v234, %v238
    %v243 = vsub.f32 %v235, %v239
    %v244 = vsub.f32 %v236, %v240
    %v245 = vsub.f32 %v237, %v241
    %v246 = vmul.f32 %v218, %v104
    %v247 = vmul.f32 %v219, %v105
    %v248 = vmul.f32 %v220, %v106
    %v249 = vmul.f32 %v221, %v107
    %v250 = vmul.f32 %v230, %v100
    %v251 = vmul.f32 %v231, %v101
    %v252 = vmul.f32 %v232, %v102
    %v253 = vmul.f32 %v233, %v103
    %v254 = vadd.f32 %v246, %v250
    %v255 = vadd.f32 %v247, %v251
    %v256 = vadd.f32 %v248, %v252
    %v257 = vadd.f32 %v249, %v253
    %v258 = vmul.f32 %v242, %v100
    %v259 = vmul.f32 %v243, %v101
    %v260 = vmul.f32 %v244, %v102
    %v261 = vmul.f32 %v245, %v103
    %v262 = vmul.f32 %v254, %v104
    %v263 = vmul.f32 %v255, %v105
    %v264 = vmul.f32 %v256, %v106
    %v265 = vmul.f32 %v257, %v107
    %v266 = vsub.f32 %v258, %v262
    %v267 = vsub.f32 %v259, %v263
    %v268 = vsub.f32 %v260, %v264
    %v269 = vsub.f32 %v261, %v265
    %v270 = vmul.f32 %v242, %v104
    %v271 = vmul.f32 %v243, %v105
    %v272 = vmul.f32 %v244, %v106
    %v273 = vmul.f32 %v245, %v107
    %v274 = vmul.f32 %v254, %v100
    %v275 = vmul.f32 %v255, %v101
    %v276 = vmul.f32 %v256, %v102
    %v277 = vmul.f32 %v257, %v103
    %v278 = vadd.f32 %v270, %v274
    %v279 = vadd.f32 %v271, %v275
    %v280 = vadd.f32 %v272, %v276
    %v281 = vadd.f32 %v273, %v277
    %v282 = vmul.f32 %v108, %v100
    %v283 = vmul.f32 %v109, %v101
    %v284 = vmul.f32 %v110, %v102
    %v285 = vmul.f32 %v111, %v103
    %v286 = vmul.f32 %v112, %v104
    %v287 = vmul.f32 %v113, %v105
    %v288 = vmul.f32 %v114, %v106
    %v289 = vmul.f32 %v115, %v107
    %v290 = vsub.f32 %v282, %v286
    %v291 = vsub.f32 %v283, %v287
    %v292 = vsub.f32 %v284, %v288
    %v293 = vsub.f32 %v285, %v289
    %v294 = vmul.f32 %v108, %v104
    %v295 = vmul.f32 %v109, %v105
    %v296 = vmul.f32 %v110, %v106
    %v297 = vmul.f32 %v111, %v107
    %v298 = vmul.f32 %v112, %v100
    %v299 = vmul.f32 %v113, %v101
    %v300 = vmul.f32 %v114, %v102
    %v301 = vmul.f32 %v115, %v103
    %v302 = vadd.f32 %v294, %v298
    %v303 = vadd.f32 %v295, %v299
    %v304 = vadd.f32 %v296, %v300
    %v305 = vadd.f32 %v297, %v301
    %v306 = vmul.f32 %v108, %v126
    %v307 = vmul.f32 %v109, %v127
    %v308 = vmul.f32 %v110, %v128
    %v309 = vmul.f32 %v111, %v129
    %v310 = vmul.f32 %v112, %v134
    %v311 = vmul.f32 %v113, %v135
    %v312 = vmul.f32 %v114, %v136
    %v313 = vmul.f32 %v115, %v137
    %v314 = vsub.f32 %v306, %v310
    %v315 = vsub.f32 %v307, %v311
    %v316 = vsub.f32 %v308, %v312
    %v317 = vsub.f32 %v309, %v313
    %v318 = vmul.f32 %v108, %v134
    %v319 = vmul.f32 %v109, %v135
    %v320 = vmul.f32 %v110, %v136
    %v321 = vmul.f32 %v111, %v137
    %v322 = vmul.f32 %v112, %v126
    %v323 = vmul.f32 %v113, %v127
    %v324 = vmul.f32 %v114, %v128
    %v325 = vmul.f32 %v115, %v129
    %v326 = vadd.f32 %v318, %v322
    %v327 = vadd.f32 %v319, %v323
    %v328 = vadd.f32 %v320, %v324
    %v329 = vadd.f32 %v321, %v325
    %v330 = vmul.f32 %v108, %v146
    %v331 = vmul.f32 %v109, %v147
    %v332 = vmul.f32 %v110, %v148
    %v333 = vmul.f32 %v111, %v149
    %v334 = vmul.f32 %v112, %v158
    %v335 = vmul.f32 %v113, %v159
    %v336 = vmul.f32 %v114, %v160
    %v337 = vmul.f32 %v115, %v161
    %v338 = vsub.f32 %v330, %v334
    %v339 = vsub.f32 %v331, %v335
    %v340 = vsub.f32 %v332, %v336
    %v341 = vsub.f32 %v333, %v337
    %v342 = vmul.f32 %v108, %v158
    %v343 = vmul.f32 %v109, %v159
    %v344 = vmul.f32 %v110, %v160
    %v345 = vmul.f32 %v111, %v161
    %v346 = vmul.f32 %v112, %v146
    %v347 = vmul.f32 %v113, %v147
    %v348 = vmul.f32 %v114, %v148
    %v349 = vmul.f32 %v115, %v149
    %v350 = vadd.f32 %v342, %v346
    %v351 = vadd.f32 %v343, %v347
    %v352 = vadd.f32 %v344, %v348
    %v353 = vadd.f32 %v345, %v349
    %v354 = vmul.f32 %v108, %v170
    %v355 = vmul.f32 %v109, %v171
    %v356 = vmul.f32 %v110, %v172
    %v357 = vmul.f32 %v111, %v173
    %v358 = vmul.f32 %v112, %v182
    %v359 = vmul.f32 %v113, %v183
    %v360 = vmul.f32 %v114, %v184
    %v361 = vmul.f32 %v115, %v185
    %v362 = vsub.f32 %v354, %v358
    %v363 = vsub.f32 %v355, %v359
    %v364 = vsub.f32 %v356, %v360
    %v365 = vsub.f32 %v357, %v361
    %v366 = vmul.f32 %v108, %v182
    %v367 = vmul.f32 %v109, %v183
    %v368 = vmul.f32 %v110, %v184
    %v369 = vmul.f32 %v111, %v185
    %v370 = vmul.f32 %v112, %v170
    %v371 = vmul.f32 %v113, %v171
    %v372 = vmul.f32 %v114, %v172
    %v373 = vmul.f32 %v115, %v173
    %v374 = vadd.f32 %v366, %v370
    %v375 = vadd.f32 %v367, %v371
    %v376 = vadd.f32 %v368, %v372
    %v377 = vadd.f32 %v369, %v373
    %v378 = vmul.f32 %v108, %v194
    %v379 = vmul.f32 %v109, %v195
    %v380 = vmul.f32 %v110, %v196
    %v381 = vmul.f32 %v111, %v197
    %v382 = vmul.f32 %v112, %v206
    %v383 = vmul.f32 %v113, %v207
    %v384 = vmul.f32 %v114, %v208
    %v385 = vmul.f32 %v115, %v209
    %v386 = vsub.f32 %v378, %v382
    %v387 = vsub.f32 %v379, %v383
    %v388 = vsub.f32 %v380, %v384
    %v389 = vsub.f32 %v381, %v385
    %v390 = vmul.f32 %v108, %v206
    %v391 = vmul.f32 %v109, %v207
    %v392 = vmul.f32 %v110, %v208
    %v393 = vmul.f32 %v111, %v209
    %v394 = vmul.f32 %v112, %v194
    %v395 = vmul.f32 %v113, %v195
    %v396 = vmul.f32 %v114, %v196
    %v397 = vmul.f32 %v115, %v197
    %v398 = vadd.f32 %v390, %v394
    %v399 = vadd.f32 %v391, %v395
    %v400 = vadd.f32 %v392, %v396
    %v401 = vadd.f32 %v393, %v397
    %v402 = vmul.f32 %v108, %v218
    %v403 = vmul.f32 %v109, %v219
    %v404 = vmul.f32 %v110, %v220
    %v405 = vmul.f32 %v111, %v221
    %v406 = vmul.f32 %v112, %v230
    %v407 = vmul.f32 %v113, %v231
    %v408 = vmul.f32 %v114, %v232
    %v409 = vmul.f32 %v115, %v233
    %v410 = vsub.f32 %v402, %v406
    %v411 = vsub.f32 %v403, %v407
    %v412 = vsub.f32 %v404, %v408
    %v413 = vsub.f32 %v405, %v409
    %v414 = vmul.f32 %v108, %v230
    %v415 = vmul.f32 %v109, %v231
    %v416 = vmul.f32 %v110, %v232
    %v417 = vmul.f32 %v111, %v233
    %v418 = vmul.f32 %v112, %v218
    %v419 = vmul.f32 %v113, %v219
    %v420 = vmul.f32 %v114, %v220
    %v421 = vmul.f32 %v115, %v221
    %v422 = vadd.f32 %v414, %v418
    %v423 = vadd.f32 %v415, %v419
    %v424 = vadd.f32 %v416, %v420
    %v425 = vadd.f32 %v417, %v421
    %v426 = vmul.f32 %v108, %v242
    %v427 = vmul.f32 %v109, %v243
    %v428 = vmul.f32 %v110, %v244
    %v429 = vmul.f32 %v111, %v245
    %v430 = vmul.f32 %v112, %v254
    %v431 = vmul.f32 %v113, %v255
    %v432 = vmul.f32 %v114, %v256
    %v433 = vmul.f32 %v115, %v257
    %v434 = vsub.f32 %v426, %v430
    %v435 = vsub.f32 %v427, %v431
    %v436 = vsub.f32 %v428, %v432
    %v437 = vsub.f32 %v429, %v433
    %v438 = vmul.f32 %v108, %v254
    %v439 = vmul.f32 %v109, %v255
    %v440 = vmul.f32 %v110, %v256
    %v441 = vmul.f32 %v111, %v257
    %v442 = vmul.f32 %v112, %v242
    %v443 = vmul.f32 %v113, %v243
    %v444 = vmul.f32 %v114, %v244
    %v445 = vmul.f32 %v115, %v245
    %v446 = vadd.f32 %v438, %v442
    %v447 = vadd.f32 %v439, %v443
    %v448 = vadd.f32 %v440, %v444
    %v449 = vadd.f32 %v441, %v445
    %450 = vmatpush.msra.mxu0 %v341
    %451 = vmatpush.msra.mxu0 %v340
    %452 = vmatpush.msra.mxu0 %v339
    %453 = vmatpush.msra.mxu0 %v338
    %454 = vmatpush.msra.mxu0 %v317
    %455 = vmatpush.msra.mxu0 %v316
    %456 = vmatpush.msra.mxu0 %v315
    %457 = vmatpush.msra.mxu0 %v314
    %458 = vmatpush.msra.mxu0 %v293
    %459 = vmatpush.msra.mxu0 %v292
    %460 = vmatpush.msra.mxu0 %v291
    %461 = vmatpush.msra.mxu0 %v290
    %462 = vmatpush.msra.mxu0 %v111
    %463 = vmatpush.msra.mxu0 %v110
    %464 = vmatpush.msra.mxu0 %v109
    %465 = vmatpush.msra.mxu0 %v108
    %466 = vmatmul.f32.gmra.mxu0 %v116
    %v467 = vpop.f32.mrf.mxu0
    %v468 = vadd.f32 0.0, %v467
    %469 = vdwg.mxu0
    %470 = vmatpush.msra.mxu0 %v437
    %471 = vmatpush.msra.mxu0 %v436
    %472 = vmatpush.msra.mxu0 %v435
    %473 = vmatpush.msra.mxu0 %v434
    %474 = vmatpush.msra.mxu0 %v413
    %475 = vmatpush.msra.mxu0 %v412
    %476 = vmatpush.msra.mxu0 %v411
    %477 = vmatpush.msra.mxu0 %v410
    %478 = vmatpush.msra.mxu0 %v389
    %479 = vmatpush.msra.mxu0 %v388
    %480 = vmatpush.msra.mxu0 %v387
    %481 = vmatpush.msra.mxu0 %v386
    %482 = vmatpush.msra.mxu0 %v365
    %483 = vmatpush.msra.mxu0 %v364
    %484 = vmatpush.msra.mxu0 %v363
    %485 = vmatpush.msra.mxu0 %v362
    %486 = vmatmul.f32.gmra.mxu0 %v117
    %v487 = vpop.f32.mrf.mxu0
    %v488 = vadd.f32 %v468, %v487
    %489 = vdwg.mxu0
    %490 = vmatpush.msra.mxu0 %v353
    %491 = vmatpush.msra.mxu0 %v352
    %492 = vmatpush.msra.mxu0 %v351
    %493 = vmatpush.msra.mxu0 %v350
    %494 = vmatpush.msra.mxu0 %v329
    %495 = vmatpush.msra.mxu0 %v328
    %496 = vmatpush.msra.mxu0 %v327
    %497 = vmatpush.msra.mxu0 %v326
    %498 = vmatpush.msra.mxu0 %v305
    %499 = vmatpush.msra.mxu0 %v304
    %500 = vmatpush.msra.mxu0 %v303
    %501 = vmatpush.msra.mxu0 %v302
    %502 = vmatpush.msra.mxu0 %v115
    %503 = vmatpush.msra.mxu0 %v114
    %504 = vmatpush.msra.mxu0 %v113
    %505 = vmatpush.msra.mxu0 %v112
    %506 = vmatmul.f32.gmra.mxu0 %v116
    %v507 = vpop.f32.mrf.mxu0
    %v508 = vadd.f32 0.0, %v507
    %509 = vdwg.mxu0
    %510 = vmatpush.msra.mxu0 %v449
    %511 = vmatpush.msra.mxu0 %v448
    %512 = vmatpush.msra.mxu0 %v447
    %513 = vmatpush.msra.mxu0 %v446
    %514 = vmatpush.msra.mxu0 %v425
    %515 = vmatpush.msra.mxu0 %v424
    %516 = vmatpush.msra.mxu0 %v423
    %517 = vmatpush.msra.mxu0 %v422
    %518 = vmatpush.msra.mxu0 %v401
    %519 = vmatpush.msra.mxu0 %v400
    %520 = vmatpush.msra.mxu0 %v399
    %521 = vmatpush.msra.mxu0 %v398
    %522 = vmatpush.msra.mxu0 %v377
    %523 = vmatpush.msra.mxu0 %v376
    %524 = vmatpush.msra.mxu0 %v375
    %525 = vmatpush.msra.mxu0 %v374
    %526 = vmatmul.f32.gmra.mxu0 %v117
    %v527 = vpop.f32.mrf.mxu0
    %v528 = vadd.f32 %v508, %v527
    %529 = vdwg.mxu0
    %530 = vst [vmem:[#allocation11] sm:$0xff] %v488
    %531 = vst [vmem:[#allocation12] sm:$0xff] %v528
    %v532 = vmul.f32 %v108, %v266
    %v533 = vmul.f32 %v109, %v267
    %v534 = vmul.f32 %v110, %v268
    %v535 = vmul.f32 %v111, %v269
    %v536 = vmul.f32 %v112, %v278
    %v537 = vmul.f32 %v113, %v279
    %v538 = vmul.f32 %v114, %v280
    %v539 = vmul.f32 %v115, %v281
    %v540 = vsub.f32 %v532, %v536
    %v541 = vsub.f32 %v533, %v537
    %v542 = vsub.f32 %v534, %v538
    %v543 = vsub.f32 %v535, %v539
    %v544 = vmul.f32 %v108, %v278
    %v545 = vmul.f32 %v109, %v279
    %v546 = vmul.f32 %v110, %v280
    %v547 = vmul.f32 %v111, %v281
    %v548 = vmul.f32 %v112, %v266
    %v549 = vmul.f32 %v113, %v267
    %v550 = vmul.f32 %v114, %v268
    %v551 = vmul.f32 %v115, %v269
    %v552 = vadd.f32 %v544, %v548
    %v553 = vadd.f32 %v545, %v549
    %v554 = vadd.f32 %v546, %v550
    %v555 = vadd.f32 %v547, %v551
    %v556 = vmul.f32 %v540, %v100
    %v557 = vmul.f32 %v541, %v101
    %v558 = vmul.f32 %v542, %v102
    %v559 = vmul.f32 %v543, %v103
    %v560 = vmul.f32 %v552, %v104
    %v561 = vmul.f32 %v553, %v105
    %v562 = vmul.f32 %v554, %v106
    %v563 = vmul.f32 %v555, %v107
    %v564 = vsub.f32 %v556, %v560
    %v565 = vsub.f32 %v557, %v561
    %v566 = vsub.f32 %v558, %v562
    %v567 = vsub.f32 %v559, %v563
    %v568 = vmul.f32 %v540, %v104
    %v569 = vmul.f32 %v541, %v105
    %v570 = vmul.f32 %v542, %v106
    %v571 = vmul.f32 %v543, %v107
    %v572 = vmul.f32 %v552, %v100
    %v573 = vmul.f32 %v553, %v101
    %v574 = vmul.f32 %v554, %v102
    %v575 = vmul.f32 %v555, %v103
    %v576 = vadd.f32 %v568, %v572
    %v577 = vadd.f32 %v569, %v573
    %v578 = vadd.f32 %v570, %v574
    %v579 = vadd.f32 %v571, %v575
    %v580 = vmul.f32 %v540, %v126
    %v581 = vmul.f32 %v541, %v127
    %v582 = vmul.f32 %v542, %v128
    %v583 = vmul.f32 %v543, %v129
    %v584 = vmul.f32 %v552, %v134
    %v585 = vmul.f32 %v553, %v135
    %v586 = vmul.f32 %v554, %v136
    %v587 = vmul.f32 %v555, %v137
    %v588 = vsub.f32 %v580, %v584
    %v589 = vsub.f32 %v581, %v585
    %v590 = vsub.f32 %v582, %v586
    %v591 = vsub.f32 %v583, %v587
    %v592 = vmul.f32 %v540, %v134
    %v593 = vmul.f32 %v541, %v135
    %v594 = vmul.f32 %v542, %v136
    %v595 = vmul.f32 %v543, %v137
    %v596 = vmul.f32 %v552, %v126
    %v597 = vmul.f32 %v553, %v127
    %v598 = vmul.f32 %v554, %v128
    %v599 = vmul.f32 %v555, %v129
    %v600 = vadd.f32 %v592, %v596
    %v601 = vadd.f32 %v593, %v597
    %v602 = vadd.f32 %v594, %v598
    %v603 = vadd.f32 %v595, %v599
    %v604 = vmul.f32 %v540, %v146
    %v605 = vmul.f32 %v541, %v147
    %v606 = vmul.f32 %v542, %v148
    %v607 = vmul.f32 %v543, %v149
    %v608 = vmul.f32 %v552, %v158
    %v609 = vmul.f32 %v553, %v159
    %v610 = vmul.f32 %v554, %v160
    %v611 = vmul.f32 %v555, %v161
    %v612 = vsub.f32 %v604, %v608
    %v613 = vsub.f32 %v605, %v609
    %v614 = vsub.f32 %v606, %v610
    %v615 = vsub.f32 %v607, %v611
    %v616 = vmul.f32 %v540, %v158
    %v617 = vmul.f32 %v541, %v159
    %v618 = vmul.f32 %v542, %v160
    %v619 = vmul.f32 %v543, %v161
    %v620 = vmul.f32 %v552, %v146
    %v621 = vmul.f32 %v553, %v147
    %v622 = vmul.f32 %v554, %v148
    %v623 = vmul.f32 %v555, %v149
    %v624 = vadd.f32 %v616, %v620
    %v625 = vadd.f32 %v617, %v621
    %v626 = vadd.f32 %v618, %v622
    %v627 = vadd.f32 %v619, %v623
    %v628 = vmul.f32 %v540, %v170
    %v629 = vmul.f32 %v541, %v171
    %v630 = vmul.f32 %v542, %v172
    %v631 = vmul.f32 %v543, %v173
    %v632 = vmul.f32 %v552, %v182
    %v633 = vmul.f32 %v553, %v183
    %v634 = vmul.f32 %v554, %v184
    %v635 = vmul.f32 %v555, %v185
    %v636 = vsub.f32 %v628, %v632
    %v637 = vsub.f32 %v629, %v633
    %v638 = vsub.f32 %v630, %v634
    %v639 = vsub.f32 %v631, %v635
    %v640 = vmul.f32 %v540, %v182
    %v641 = vmul.f32 %v541, %v183
    %v642 = vmul.f32 %v542, %v184
    %v643 = vmul.f32 %v543, %v185
    %v644 = vmul.f32 %v552, %v170
    %v645 = vmul.f32 %v553, %v171
    %v646 = vmul.f32 %v554, %v172
    %v647 = vmul.f32 %v555, %v173
    %v648 = vadd.f32 %v640, %v644
    %v649 = vadd.f32 %v641, %v645
    %v650 = vadd.f32 %v642, %v646
    %v651 = vadd.f32 %v643, %v647
    %v652 = vmul.f32 %v540, %v194
    %v653 = vmul.f32 %v541, %v195
    %v654 = vmul.f32 %v542, %v196
    %v655 = vmul.f32 %v543, %v197
    %v656 = vmul.f32 %v552, %v206
    %v657 = vmul.f32 %v553, %v207
    %v658 = vmul.f32 %v554, %v208
    %v659 = vmul.f32 %v555, %v209
    %v660 = vsub.f32 %v652, %v656
    %v661 = vsub.f32 %v653, %v657
    %v662 = vsub.f32 %v654, %v658
    %v663 = vsub.f32 %v655, %v659
    %v664 = vmul.f32 %v540, %v206
    %v665 = vmul.f32 %v541, %v207
    %v666 = vmul.f32 %v542, %v208
    %v667 = vmul.f32 %v543, %v209
    %v668 = vmul.f32 %v552, %v194
    %v669 = vmul.f32 %v553, %v195
    %v670 = vmul.f32 %v554, %v196
    %v671 = vmul.f32 %v555, %v197
    %v672 = vadd.f32 %v664, %v668
    %v673 = vadd.f32 %v665, %v669
    %v674 = vadd.f32 %v666, %v670
    %v675 = vadd.f32 %v667, %v671
    %v676 = vmul.f32 %v540, %v218
    %v677 = vmul.f32 %v541, %v219
    %v678 = vmul.f32 %v542, %v220
    %v679 = vmul.f32 %v543, %v221
    %v680 = vmul.f32 %v552, %v230
    %v681 = vmul.f32 %v553, %v231
    %v682 = vmul.f32 %v554, %v232
    %v683 = vmul.f32 %v555, %v233
    %v684 = vsub.f32 %v676, %v680
    %v685 = vsub.f32 %v677, %v681
    %v686 = vsub.f32 %v678, %v682
    %v687 = vsub.f32 %v679, %v683
    %v688 = vmul.f32 %v540, %v230
    %v689 = vmul.f32 %v541, %v231
    %v690 = vmul.f32 %v542, %v232
    %v691 = vmul.f32 %v543, %v233
    %v692 = vmul.f32 %v552, %v218
    %v693 = vmul.f32 %v553, %v219
    %v694 = vmul.f32 %v554, %v220
    %v695 = vmul.f32 %v555, %v221
    %v696 = vadd.f32 %v688, %v692
    %v697 = vadd.f32 %v689, %v693
    %v698 = vadd.f32 %v690, %v694
    %v699 = vadd.f32 %v691, %v695
    %v700 = vmul.f32 %v540, %v242
    %v701 = vmul.f32 %v541, %v243
    %v702 = vmul.f32 %v542, %v244
    %v703 = vmul.f32 %v543, %v245
    %v704 = vmul.f32 %v552, %v254
    %v705 = vmul.f32 %v553, %v255
    %v706 = vmul.f32 %v554, %v256
    %v707 = vmul.f32 %v555, %v257
    %v708 = vsub.f32 %v700, %v704
    %v709 = vsub.f32 %v701, %v705
    %v710 = vsub.f32 %v702, %v706
    %v711 = vsub.f32 %v703, %v707
    %v712 = vmul.f32 %v540, %v254
    %v713 = vmul.f32 %v541, %v255
    %v714 = vmul.f32 %v542, %v256
    %v715 = vmul.f32 %v543, %v257
    %v716 = vmul.f32 %v552, %v242
    %v717 = vmul.f32 %v553, %v243
    %v718 = vmul.f32 %v554, %v244
    %v719 = vmul.f32 %v555, %v245
    %v720 = vadd.f32 %v712, %v716
    %v721 = vadd.f32 %v713, %v717
    %v722 = vadd.f32 %v714, %v718
    %v723 = vadd.f32 %v715, %v719
    %724 = vmatpush.msra.mxu0 %v615
    %725 = vmatpush.msra.mxu0 %v614
    %726 = vmatpush.msra.mxu0 %v613
    %727 = vmatpush.msra.mxu0 %v612
    %728 = vmatpush.msra.mxu0 %v591
    %729 = vmatpush.msra.mxu0 %v590
    %730 = vmatpush.msra.mxu0 %v589
    %731 = vmatpush.msra.mxu0 %v588
    %732 = vmatpush.msra.mxu0 %v567
    %733 = vmatpush.msra.mxu0 %v566
    %734 = vmatpush.msra.mxu0 %v565
    %735 = vmatpush.msra.mxu0 %v564
    %736 = vmatpush.msra.mxu0 %v543
    %737 = vmatpush.msra.mxu0 %v542
    %738 = vmatpush.msra.mxu0 %v541
    %739 = vmatpush.msra.mxu0 %v540
    %740 = vmatmul.f32.gmra.mxu0 %v116
    %v741 = vpop.f32.mrf.mxu0
    %v742 = vadd.f32 0.0, %v741
    %743 = vdwg.mxu0
    %744 = vmatpush.msra.mxu0 %v711
    %745 = vmatpush.msra.mxu0 %v710
    %746 = vmatpush.msra.mxu0 %v709
    %747 = vmatpush.msra.mxu0 %v708
    %748 = vmatpush.msra.mxu0 %v687
    %749 = vmatpush.msra.mxu0 %v686
    %750 = vmatpush.msra.mxu0 %v685
    %751 = vmatpush.msra.mxu0 %v684
    %752 = vmatpush.msra.mxu0 %v663
    %753 = vmatpush.msra.mxu0 %v662
    %754 = vmatpush.msra.mxu0 %v661
    %755 = vmatpush.msra.mxu0 %v660
    %756 = vmatpush.msra.mxu0 %v639
    %757 = vmatpush.msra.mxu0 %v638
    %758 = vmatpush.msra.mxu0 %v637
    %759 = vmatpush.msra.mxu0 %v636
    %760 = vmatmul.f32.gmra.mxu0 %v117
    %v761 = vpop.f32.mrf.mxu0
    %v762 = vadd.f32 %v742, %v761
    %763 = vdwg.mxu0
    %764 = vmatpush.msra.mxu0 %v627
    %765 = vmatpush.msra.mxu0 %v626
    %766 = vmatpush.msra.mxu0 %v625
    %767 = vmatpush.msra.mxu0 %v624
    %768 = vmatpush.msra.mxu0 %v603
    %769 = vmatpush.msra.mxu0 %v602
    %770 = vmatpush.msra.mxu0 %v601
    %771 = vmatpush.msra.mxu0 %v600
    %772 = vmatpush.msra.mxu0 %v579
    %773 = vmatpush.msra.mxu0 %v578
    %774 = vmatpush.msra.mxu0 %v577
    %775 = vmatpush.msra.mxu0 %v576
    %776 = vmatpush.msra.mxu0 %v555
    %777 = vmatpush.msra.mxu0 %v554
    %778 = vmatpush.msra.mxu0 %v553
    %779 = vmatpush.msra.mxu0 %v552
    %780 = vmatmul.f32.gmra.mxu0 %v116
    %v781 = vpop.f32.mrf.mxu0
    %v782 = vadd.f32 0.0, %v781
    %783 = vdwg.mxu0
    %784 = vmatpush.msra.mxu0 %v723
    %785 = vmatpush.msra.mxu0 %v722
    %786 = vmatpush.msra.mxu0 %v721
    %787 = vmatpush.msra.mxu0 %v720
    %788 = vmatpush.msra.mxu0 %v699
    %789 = vmatpush.msra.mxu0 %v698
    %790 = vmatpush.msra.mxu0 %v697
    %791 = vmatpush.msra.mxu0 %v696
    %792 = vmatpush.msra.mxu0 %v675
    %793 = vmatpush.msra.mxu0 %v674
    %794 = vmatpush.msra.mxu0 %v673
    %795 = vmatpush.msra.mxu0 %v672
    %796 = vmatpush.msra.mxu0 %v651
    %797 = vmatpush.msra.mxu0 %v650
    %798 = vmatpush.msra.mxu0 %v649
    %799 = vmatpush.msra.mxu0 %v648
    %800 = vmatmul.f32.gmra.mxu0 %v117
    %v801 = vpop.f32.mrf.mxu0
    %v802 = vadd.f32 %v782, %v801
    %803 = vdwg.mxu0
    %804 = vst [vmem:[#allocation11 + $0x8] sm:$0xff] %v762
    %805 = vst [vmem:[#allocation12 + $0x8] sm:$0xff] %v802
    // Predicated region
    $region42: #{tpu_custom_call.1} parent=1 // pred_check
      _
    $region43: #{tpu_custom_call.1} parent=1 // pred_check_branch
      %807 = sbr.rel (0) target = $region45
    $region44: #{tpu_custom_call.1} parent=1 // pred_region
      %809 = vsyncadd [#allocation4], 0
      %s810 = sshll.u32 [#allocation11], 4
      %s811 = int_to_ptr.vmem [resolvable:$true] %s810
      %s812 = sshll.u32 %s5, 4
      %s813 = int_to_ptr.hbm [resolvable:$true] %s812
      %818 = dma.vmem_to_hbm [thread:$0]  %s811, 256, %s813, [#allocation4], 128, 128, 8
    $region45: #{tpu_custom_call.1} parent=1 // pred_fallthru
      _
    // Predicated region
    $region46: #{tpu_custom_call.1} parent=1 // pred_check
      _
    $region47: #{tpu_custom_call.1} parent=1 // pred_check_branch
      %820 = sbr.rel (0) target = $region49
    $region48: #{tpu_custom_call.1} parent=1 // pred_region
      %822 = vsyncadd [#allocation13], 0
      %s823 = sshll.u32 [#allocation12], 4
      %s824 = int_to_ptr.vmem [resolvable:$true] %s823
      %s825 = sshll.u32 %s6, 4
      %s826 = int_to_ptr.hbm [resolvable:$true] %s825
      %831 = dma.vmem_to_hbm [thread:$0]  %s824, 256, %s826, [#allocation13], 128, 128, 8
    $region49: #{tpu_custom_call.1} parent=1 // pred_fallthru
      _
    // Predicated region
    $region50: #{tpu_custom_call.1} parent=1 // pred_check
      _
    $region51: #{tpu_custom_call.1} parent=1 // pred_check_branch
      %833 = sbr.rel (0) target = $region53
    $region52: #{tpu_custom_call.1} parent=1 // pred_region
      %835 = dma.done [#allocation4], 256
    $region53: #{tpu_custom_call.1} parent=1 // pred_fallthru
      _
    // Predicated region
    $region54: #{tpu_custom_call.1} parent=1 // pred_check
      _
    $region55: #{tpu_custom_call.1} parent=1 // pred_check_branch
      %837 = sbr.rel (0) target = $region57
    $region56: #{tpu_custom_call.1} parent=1 // pred_region
      %839 = dma.done [#allocation13], 256
    $region57: #{tpu_custom_call.1} parent=1 // pred_fallthru
      _
    %840 = vsyncpa [#allocation3], 1
    %841 = vsyncpa [#allocation6], 1
    %842 = vsyncpa [#allocation9], 1
    %843 = vsyncpa [#allocation4], 1
    %844 = vsyncpa [#allocation13], 1

</llo_original>
